<compile_context>
chip_gen: v5e
topology: v5e:2x2
jax: 0.10.0
libtpu: 0.0.40
codegen_flags: <defaults>
</compile_context>

<pallas_src>
import jax
import jax.numpy as jnp
from jax.experimental import pallas as pl
from jax.experimental.pallas import tpu as pltpu


# -----------------------------------------------------------------------------
# Interface mirror (semantics of LayerInterface / BaseEncoderInterface.forward)
# -----------------------------------------------------------------------------
class LayerInterface:
    def __init__(self, *args, **kwargs) -> None:
        pass

    def forward(self, *args, **kwargs):
        error_msg = f"forward method not implemented in {self.__class__}"
        if len(args) > 0:
            error_msg += f"\n\targs: {args}"
        if len(kwargs) > 0:
            error_msg += f"\n\tkwargs: {kwargs}"
        raise NotImplementedError(error_msg)


class BaseEncoderInterface(LayerInterface):
    def __init__(self, *args, **kwargs) -> None:
        super().__init__(*args, **kwargs)

    def forward(self, *args, **kwargs):
        # Mirrors the PyTorch module: delegates to the abstract base -> raises.
        super().forward(*args, **kwargs)


# -----------------------------------------------------------------------------
# Pallas kernel: lane-dense, row-tiled identity copy (placeholder hot path)
# -----------------------------------------------------------------------------
_SUBLANE = 8        # f32 sublane granularity
_LANE_WIDTH = 512   # lane-dense last dim: 4 x 128 lanes, unmasked vst
_MAX_TILE_ROWS = 256  # 256 x 512 x 4B = 512 KiB per f32 block


def _round_up(a: int, b: int) -> int:
    return pl.cdiv(a, b) * b


def _copy_kernel(x_ref, o_ref):
    # Whole (tile_rows, LANE_WIDTH) block resident in VMEM; full-width stores.
    o_ref[...] = x_ref[...]


def pallas_identity(x: jax.Array) -> jax.Array:
    """Identity pass-through via a tiled, pipelined Pallas copy.

    Works for any input shape: flattens to a lane-dense (rows, 512) slab,
    pads the tail, tiles rows, then trims/reshapes back.
    """
    orig_shape = x.shape
    n = x.size

    # Rows of the lane-dense slab, rounded to the sublane multiple, then to a
    # whole number of tiles so the grid divides exactly.
    rows_min = _round_up(pl.cdiv(n, _LANE_WIDTH), _SUBLANE)
    tile_rows = min(_MAX_TILE_ROWS, rows_min)
    rows = _round_up(rows_min, tile_rows)
    n_pad = rows * _LANE_WIDTH

    flat = x.reshape(-1)
    if n_pad != n:
        flat = jnp.pad(flat, (0, n_pad - n))
    slab = flat.reshape(rows, _LANE_WIDTH)

    grid = (rows // tile_rows,)
    out = pl.pallas_call(
        _copy_kernel,
        out_shape=jax.ShapeDtypeStruct((rows, _LANE_WIDTH), slab.dtype),
        grid=grid,
        in_specs=[pl.BlockSpec((tile_rows, _LANE_WIDTH), lambda i: (i, 0))],
        out_specs=pl.BlockSpec((tile_rows, _LANE_WIDTH), lambda i: (i, 0)),
        # Identity: let XLA alias the output onto the input buffer.
        input_output_aliases={0: 0},
        compiler_params=pltpu.CompilerParams(
            # Row-tile axis is independent -> shard across TCs on v7x.
            dimension_semantics=("parallel",),
            # ~2 MiB of double-buffered tiles; explicit budget, safe on v7x.
            vmem_limit_bytes=32 * 1024 * 1024,
        ),
    )(slab)

    return out.reshape(-1)[:n].reshape(orig_shape)


class IdentityEncoder(BaseEncoderInterface):
    """Concrete subclass supplying a Pallas-backed forward."""

    def forward(self, x, x_lens):
        # Returns (encoded, encoded_lens), the usual EncoderResult convention.
        # TODO(synk): a real encoder must mask positions beyond x_lens.
        return pallas_identity(x), x_lens


# -----------------------------------------------------------------------------
# Demo / smoke test
# -----------------------------------------------------------------------------
if __name__ == "__main__":
    key = jax.random.PRNGKey(0)

    # 1) Interface semantics: the abstract forward must raise.
    B, T, D = 2, 8, 32  # (batch, seq, hidden)
    x = jax.random.normal(key, (B, T, D), dtype=jnp.float32)
    x_lens = jnp.array([T, T - 2], dtype=jnp.int32)

    base = BaseEncoderInterface()
    raised = False
    try:
        base.forward(x, x_lens)
    except NotImplementedError:
        raised = True
    assert raised, "BaseEncoderInterface.forward should raise NotImplementedError"

    # 2) Concrete encoder with the Pallas kernel (small, single-tile path).
    enc = IdentityEncoder()
    out, out_lens = enc.forward(x, x_lens)
    out = jax.block_until_ready(out)
    assert out.shape == (B, T, D)
    assert out.dtype == x.dtype
    assert bool(jnp.allclose(out, x))
    assert bool(jnp.array_equal(out_lens, x_lens))

    # 3) Multi-tile path: exercises a real grid (several pipelined row tiles).
    key2 = jax.random.PRNGKey(1)
    x_big = jax.random.normal(key2, (4, 256, 512), dtype=jnp.float32)
    out_big = jax.block_until_ready(pallas_identity(x_big))
    assert out_big.shape == x_big.shape
    assert bool(jnp.allclose(out_big, x_big))

    print("KERNEL_OK")
</pallas_src>

<mosaic_0001>
module attributes {stable_mosaic.version = 11 : i64} {
  func.func @_copy_kernel(%arg0: i32, %arg1: memref<8x512xf32, #tpu.memory_space<vmem>>, %arg2: memref<8x512xf32, #tpu.memory_space<vmem>>) attributes {dimension_semantics = [#tpu.dimension_semantics<parallel>], iteration_bounds = array<i64: 1>, scalar_prefetch = 0 : i64, scratch_operands = 0 : i64, tpu.core_type = #tpu.core_type<tc>, window_params = [{transform_indices = @transform_0, window_bounds = array<i64: 8, 512>}, {transform_indices = @transform_1, window_bounds = array<i64: 8, 512>}]} {
    %c0 = arith.constant 0 : index
    %c0_0 = arith.constant 0 : index
    %0 = vector.load %arg1[%c0, %c0_0] : memref<8x512xf32, #tpu.memory_space<vmem>>, vector<8x512xf32>
    %c0_1 = arith.constant 0 : index
    %c0_2 = arith.constant 0 : index
    %1 = vector.load %arg2[%c0_1, %c0_2] : memref<8x512xf32, #tpu.memory_space<vmem>>, vector<8x512xf32>
    tpu.vector_store %arg2[%c0_1, %c0_2], %0 {strides = array<i32>} : memref<8x512xf32, #tpu.memory_space<vmem>>, vector<8x512xf32>,
    return
  }
  func.func @transform_0(%arg0: i32) -> (i32, i32) {
    %c0_i32 = arith.constant 0 : i32
    %c0_i32_0 = arith.constant 0 : i32
    return %arg0, %c0_i32 : i32, i32
  }
  func.func @transform_1(%arg0: i32) -> (i32, i32) {
    %c0_i32 = arith.constant 0 : i32
    %c0_i32_0 = arith.constant 0 : i32
    return %arg0, %c0_i32 : i32, i32
  }
}

</mosaic_0001>

<llo_original>
// kernel: tpu_custom_call.1
$region0: #{tpu_custom_call.1}
  #allocation0 [shape = 'u32[]', space=smem, size = 0x4, offset = 0x4, fixed_abs, tag = 'smem constant byte address 0x4 - core index']
  #allocation1 [shape = 'u32[72,128]{1,0:T(1,128)}', space=vmem, size = 0x9000, scoped, tag = 'internal scratch']
  %s0 = inlined_call_operand.hbm [shape: f32[8,512], index: 0, kind: input, shape index: {}, may-alias: {0,1}]
  %s1 = inlined_call_operand.hbm [shape: f32[8,512], index: 1, kind: output, shape index: {}, may-alias: {0,1}]
  %s2 = sld [smem:[#allocation0]]
  $region18: #{tpu_custom_call.1} parent=0
    _
  %s4 = ssub.s32 1, %s2
  %s5 = scalar_select 0, %s4, %s2
  $region1: #{tpu_custom_call.1} parent=0
    #allocation2 [shape = 'u8[16384]{0}', space=vmem, size = 0x4000, scoped, tag = 'input window, operand 0, single buffered']
    #allocation3 [shape = 's32[1]{0}', space=sflag, size = 0x4, scoped, tag = 'scoped memory for tpu_custom_call.1']
    #allocation4 [shape = 's32[1]{0}', space=sflag, size = 0x4, scoped, tag = 'scoped memory for tpu_custom_call.1']
    #allocation5 [shape = 'u8[16384]{0}', space=vmem, size = 0x4000, scoped, tag = 'output window, operand 0, single buffered']
    %6 = vsyncpa [#allocation3], 0
    %7 = vsyncpa [#allocation4], 0
    // Predicated region
    $region2: #{tpu_custom_call.1} parent=1 // pred_check
      _
    $region3: #{tpu_custom_call.1} parent=1 // pred_check_branch
      %9 = sbr.rel (0) target = $region5
    $region4: #{tpu_custom_call.1} parent=1 // pred_region
      %11 = vsyncadd [#allocation3], 0
      %s13 = sshll.u32 %s0, 4
      %s14 = int_to_ptr.hbm [resolvable:$true] %s13
      %s15 = sshll.u32 [#allocation2], 4
      %s16 = int_to_ptr.vmem [resolvable:$true] %s15
      %18 = dma.hbm_to_vmem [thread:$0]  %s14, 512, %s16, [#allocation3]
    $region5: #{tpu_custom_call.1} parent=1 // pred_fallthru
      _
    // Predicated region
    $region6: #{tpu_custom_call.1} parent=1 // pred_check
      _
    $region7: #{tpu_custom_call.1} parent=1 // pred_check_branch
      %20 = sbr.rel (0) target = $region9
    $region8: #{tpu_custom_call.1} parent=1 // pred_region
      %22 = dma.done [#allocation3], 512
    $region9: #{tpu_custom_call.1} parent=1 // pred_fallthru
      _
    %v23 = vld [vmem:[#allocation2] sm:$0xff]
    %v24 = vld [vmem:[#allocation2 + $0x8] sm:$0xff]
    %v25 = vld [vmem:[#allocation2 + $0x10] sm:$0xff]
    %v26 = vld [vmem:[#allocation2 + $0x18] sm:$0xff]
    %27 = vst [vmem:[#allocation5] sm:$0xff] %v23
    %28 = vst [vmem:[#allocation5 + $0x8] sm:$0xff] %v24
    %29 = vst [vmem:[#allocation5 + $0x10] sm:$0xff] %v25
    %30 = vst [vmem:[#allocation5 + $0x18] sm:$0xff] %v26
    // Predicated region
    $region10: #{tpu_custom_call.1} parent=1 // pred_check
      _
    $region11: #{tpu_custom_call.1} parent=1 // pred_check_branch
      %32 = sbr.rel (0) target = $region13
    $region12: #{tpu_custom_call.1} parent=1 // pred_region
      %34 = vsyncadd [#allocation4], 0
      %s36 = sshll.u32 [#allocation5], 4
      %s37 = int_to_ptr.vmem [resolvable:$true] %s36
      %s38 = sshll.u32 %s1, 4
      %s39 = int_to_ptr.hbm [resolvable:$true] %s38
      %41 = dma.vmem_to_hbm [thread:$0]  %s37, 512, %s39, [#allocation4]
    $region13: #{tpu_custom_call.1} parent=1 // pred_fallthru
      _
    // Predicated region
    $region14: #{tpu_custom_call.1} parent=1 // pred_check
      _
    $region15: #{tpu_custom_call.1} parent=1 // pred_check_branch
      %43 = sbr.rel (0) target = $region17
    $region16: #{tpu_custom_call.1} parent=1 // pred_region
      %45 = dma.done [#allocation4], 512
    $region17: #{tpu_custom_call.1} parent=1 // pred_fallthru
      _
    %46 = vsyncpa [#allocation3], 1
    %47 = vsyncpa [#allocation4], 1

</llo_original>
